<compile_context>
chip_gen: v7x
topology: tpu7x:2x2x1
jax: 0.10.0
libtpu: 0.0.40
codegen_flags: <defaults>
</compile_context>

<pallas_src>
import functools

import jax
import jax.numpy as jnp
from jax.experimental import pallas as pl
from jax.experimental.pallas import tpu as pltpu

_SUB = 8  # f32 sublane tile height


@functools.lru_cache()
def _roll_moves_up():
    """True iff pltpu.roll(x, +s, axis=-1) moves data toward higher lane indices
    (jnp.roll convention). Probed once so the tap shifts are robust to the rotate
    direction convention of the installed jax/Mosaic version."""
    def probe(x_ref, o_ref):
        o_ref[...] = pltpu.roll(x_ref[...], shift=1, axis=1)

    x = jnp.broadcast_to(jax.lax.iota(jnp.float32, 128), (_SUB, 128))
    o = pl.pallas_call(
        probe, out_shape=jax.ShapeDtypeStruct((_SUB, 128), jnp.float32))(x)
    return bool(o[0, 1] == 0.0)


def _resnet_block_kernel(x_ref, w1_ref, w2_ref, o_ref, *,
                         C, H, W, KH, KW, taps_per_group, roll_up):
    """Fused ResnetBlock forward on one batch chunk.

    Layout: sublanes = channels (replicated `taps_per_group` times, zero-padded to
    8 rows), lanes = flattened (image, y, x) of the chunk.

    x_ref  : (8, L)  f32,  L = images_per_block * H * W
    w1_ref : (8, K)  f32   fused conv1 weights + bias columns, rows replicated
    w2_ref : (C, K)  f32   fused conv2 weights + bias columns
    o_ref  : (C, L)  f32
    K = 8 * ceil((KH*KW + 1) / taps_per_group)
    """
    SUB, L = x_ref.shape

    # Lane-position decodes, boundary masks and sublane bands (shared by both convs).
    pos = jax.lax.broadcasted_iota(jnp.int32, (SUB, L), 1)
    col = pos % W
    row = (pos // W) % H
    sub = jax.lax.broadcasted_iota(jnp.int32, (SUB, L), 0)

    taps = [(kh - KH // 2, kw - KW // 2) for kh in range(KH) for kw in range(KW)]

    def tap_mask(dy, dx):
        m = None

        def conj(a, b):
            return b if a is None else a & b

        if dx > 0:
            m = conj(m, col < W - dx)
        if dx < 0:
            m = conj(m, col >= -dx)
        if dy > 0:
            m = conj(m, row < H - dy)
        if dy < 0:
            m = conj(m, row >= -dy)
        return m

    masks = [tap_mask(dy, dx) for dy, dx in taps]
    n_pseudo = len(taps) + 1                                    # + bias pseudo-tap
    n_groups = -(-n_pseudo // taps_per_group)
    bands = [(sub >= j * C) & (sub < (j + 1) * C)
             for j in range(taps_per_group)]

    def shifted_slab(t, a):
        """Pseudo-tap t of activations `a`, zero outside the image borders."""
        if t == n_pseudo - 1:                                   # bias pseudo-tap
            return jnp.ones((SUB, L), jnp.float32)
        dy, dx = taps[t]
        d = dy * W + dx                                         # flat lane shift
        if d == 0:
            s = a
        else:
            s = pltpu.roll(a, shift=(-d) % L if roll_up else d % L, axis=1)
        m = masks[t]
        return s if m is None else jnp.where(m, s, 0.0)

    def conv(a, w_ref):
        """One fused KHxKW conv (+bias) = a single (rows, K) x (K, L) MXU matmul."""
        pieces = []
        for g in range(n_groups):
            piece = jnp.zeros((SUB, L), jnp.float32)
            for j in range(taps_per_group):
                t = g * taps_per_group + j
                if t >= n_pseudo:
                    break                                        # zero-padded group
                piece = jnp.where(bands[j], shifted_slab(t, a), piece)
            pieces.append(piece)
        stacked = jnp.concatenate(pieces, axis=0)                # (K, L), tile-aligned
        return jnp.dot(w_ref[...], stacked,                      # default bf16 MXU pass
                       preferred_element_type=jnp.float32)

    # conv1 -> Norm(None) -> ReLU   (rows of h replicated like the input rows)
    h = jnp.maximum(conv(x_ref[...], w1_ref), 0.0)
    # conv2 -> Norm(None) -> + residual (re-read; not held live) -> ReLU
    o_ref[...] = jnp.maximum(conv(h, w2_ref) + x_ref[0:C, :], 0.0)


def resnet_block(x, w1, b1, w2, b2, *, images_per_block=1):
    """x: (N, C, H, W) f32; w*: (C, C, KH, KW) f32 (OIHW); b*: (C,) f32."""
    N, C, H, W = x.shape
    KH, KW = int(w1.shape[2]), int(w1.shape[3])
    HW = H * W
    NB = images_per_block
    L = NB * HW

    assert N % NB == 0, "images_per_block must divide the batch"
    assert L % 128 == 0, "per-step lane extent must be a multiple of 128"
    assert KH % 2 == 1 and KW % 2 == 1, "expects 'same' conv (stride=1, pad=k//2)"
    if C > _SUB:
        raise NotImplementedError("num_channels > 8 not supported")  # see TODO above

    tpg = max(1, _SUB // C)                  # pseudo-taps packed per sublane tile
    n_pseudo = KH * KW + 1                   # taps + bias pseudo-tap
    n_groups = -(-n_pseudo // tpg)
    kdim = _SUB * n_groups                   # fused contraction size (40 for 3x3, C=4)

    # Activations: channels on sublanes (replicated tpg times), batch+space on lanes.
    x2 = jnp.transpose(x, (1, 0, 2, 3)).reshape(C, N * HW).astype(jnp.float32)
    x2 = jnp.pad(jnp.tile(x2, (tpg, 1)), ((0, _SUB - tpg * C), (0, 0)))

    # Fused weights: column 8*g + j*C + ci multiplies input channel ci of
    # pseudo-tap t = g*tpg + j; the last pseudo-tap is the all-ones bias tap.
    def fused_weight(w, b):
        wt = jnp.transpose(w, (0, 2, 3, 1)).reshape(C, KH * KW, C)   # [co, t, ci]
        bias_tap = jnp.zeros((C, 1, C), w.dtype).at[:, 0, 0].set(b)
        wt = jnp.concatenate([wt, bias_tap], axis=1)                 # (C, n_pseudo, C)
        wf = jnp.zeros((C, n_groups, _SUB), jnp.float32)
        for t in range(n_pseudo):
            g, j = divmod(t, tpg)
            wf = wf.at[:, g, j * C:(j + 1) * C].set(wt[:, t, :])
        return wf.reshape(C, kdim)

    wf1, wf2 = fused_weight(w1, b1), fused_weight(w2, b2)
    # conv1 output rows replicated like the input rows so conv2 can consume them.
    wf1 = jnp.pad(jnp.tile(wf1, (tpg, 1)), ((0, _SUB - tpg * C), (0, 0)))

    kernel = functools.partial(
        _resnet_block_kernel, C=C, H=H, W=W, KH=KH, KW=KW,
        taps_per_group=tpg, roll_up=_roll_moves_up())

    out2 = pl.pallas_call(
        kernel,
        out_shape=jax.ShapeDtypeStruct((C, N * HW), jnp.float32),
        grid_spec=pltpu.PrefetchScalarGridSpec(
            num_scalar_prefetch=0,
            grid=(N // NB,),
            in_specs=[
                pl.BlockSpec((_SUB, L), lambda i: (0, i)),     # activations
                pl.BlockSpec((_SUB, kdim), lambda i: (0, 0)),  # fused conv1 w+b
                pl.BlockSpec((C, kdim), lambda i: (0, 0)),     # fused conv2 w+b
            ],
            out_specs=pl.BlockSpec((C, L), lambda i: (0, i)),
        ),
        compiler_params=pltpu.CompilerParams(
            dimension_semantics=("parallel",)),
    )(x2, wf1, wf2)

    return jnp.transpose(out2.reshape(C, N, H, W), (1, 0, 2, 3))


def _reference_forward(x, w1, b1, w2, b2):
    """Plain-JAX reference of the PyTorch forward (norm=None, activation=relu)."""
    def conv(inp, w, b):
        ph, pw = w.shape[2] // 2, w.shape[3] // 2
        y = jax.lax.conv_general_dilated(
            inp, w, window_strides=(1, 1), padding=((ph, ph), (pw, pw)),
            dimension_numbers=("NCHW", "OIHW", "NCHW"),
            precision=jax.lax.Precision.HIGHEST)
        return y + b[None, :, None, None]

    out = jnp.maximum(conv(x, w1, b1), 0.0)          # conv1 -> norm(None) -> relu
    out = conv(out, w2, b2)                          # conv2 -> norm(None)
    return jnp.maximum(out + x, 0.0)                 # + residual -> relu


if __name__ == "__main__":
    # Small deterministic shapes: N=2, C=4, H=W=16, kernel=3, stride=1, pad=1.
    N, C, H, W = 2, 4, 16, 16
    KH = KW = 3

    key = jax.random.PRNGKey(0)
    kx, kw1, kb1, kw2, kb2 = jax.random.split(key, 5)

    fan_in = C * KH * KW
    bound = 1.0 / jnp.sqrt(fan_in)  # PyTorch-style uniform init bound

    x = jax.random.normal(kx, (N, C, H, W), dtype=jnp.float32)
    w1 = jax.random.uniform(kw1, (C, C, KH, KW), jnp.float32, -bound, bound)
    b1 = jax.random.uniform(kb1, (C,), jnp.float32, -bound, bound)
    w2 = jax.random.uniform(kw2, (C, C, KH, KW), jnp.float32, -bound, bound)
    b2 = jax.random.uniform(kb2, (C,), jnp.float32, -bound, bound)

    out = resnet_block(x, w1, b1, w2, b2)
    out = jax.block_until_ready(out)

    ref = _reference_forward(x, w1, b1, w2, b2)
    assert out.shape == (N, C, H, W)
    # Channel mixing now runs at default (single-pass bf16) MXU precision while the
    # reference is f32/HIGHEST, so allow bf16-level tolerance.
    assert jnp.allclose(out, ref, rtol=2e-2, atol=2e-2), "mismatch vs reference"

    print("KERNEL_OK")
</pallas_src>

<mosaic_0001>
module attributes {stable_mosaic.version = 11 : i64} {
  func.func @probe(%arg0: memref<8x128xf32, #tpu.memory_space<vmem>>, %arg1: memref<8x128xf32, #tpu.memory_space<vmem>>) attributes {dimension_semantics = [], scalar_prefetch = 0 : i64, scratch_operands = 0 : i64, tpu.core_type = #tpu.core_type<tc>} {
    %c0 = arith.constant 0 : index
    %c0_0 = arith.constant 0 : index
    %0 = vector.load %arg0[%c0, %c0_0] : memref<8x128xf32, #tpu.memory_space<vmem>>, vector<8x128xf32>
    %c1_i32 = arith.constant 1 : i32
    %1 = tpu.dynamic_rotate %0 by %c1_i32 dim 1 : vector<8x128xf32>, i32 -> vector<8x128xf32>
    %c0_1 = arith.constant 0 : index
    %c0_2 = arith.constant 0 : index
    %2 = vector.load %arg1[%c0_1, %c0_2] : memref<8x128xf32, #tpu.memory_space<vmem>>, vector<8x128xf32>
    tpu.vector_store %arg1[%c0_1, %c0_2], %1 {strides = array<i32>} : memref<8x128xf32, #tpu.memory_space<vmem>>, vector<8x128xf32>,
    return
  }
}

</mosaic_0001>

<llo_original>
// kernel: tpu_custom_call.1
$region0: #{tpu_custom_call.1}
  #allocation0 [shape = 'u32[]', space=smem, size = 0x4, offset = 0x4, fixed_abs, tag = 'smem constant byte address 0x4 - core index']
  #allocation1 [shape = 'u32[144,128]{1,0:T(1,128)}', space=vmem, size = 0x12000, scoped, tag = 'internal scratch']
  %s0 = inlined_call_operand.hbm [shape: f32[8,128], index: 0, kind: input, shape index: {}]
  %s1 = inlined_call_operand.hbm [shape: f32[8,128], index: 1, kind: output, shape index: {}]
  %s2 = sld [smem:[#allocation0]]
  $region18: #{tpu_custom_call.1} parent=0
    _
  %s4 = ssub.s32 1, %s2
  %s5 = scalar_select 0, %s4, %s2
  $region1: #{tpu_custom_call.1} parent=0
    #allocation2 [shape = 'u8[4096]{0}', space=vmem, size = 0x1000, scoped, tag = 'input window, operand 0, single buffered']
    #allocation3 [shape = 's32[1]{0}', space=sflag, size = 0x4, scoped, tag = 'scoped memory for tpu_custom_call.1']
    #allocation4 [shape = 's32[1]{0}', space=sflag, size = 0x4, scoped, tag = 'scoped memory for tpu_custom_call.1']
    #allocation5 [shape = 'u8[4096]{0}', space=vmem, size = 0x1000, scoped, tag = 'output window, operand 0, single buffered']
    %6 = vsyncpa [#allocation3], 0
    %7 = vsyncpa [#allocation4], 0
    // Predicated region
    $region2: #{tpu_custom_call.1} parent=1 // pred_check
      _
    $region3: #{tpu_custom_call.1} parent=1 // pred_check_branch
      %9 = sbr.rel (0) target = $region5
    $region4: #{tpu_custom_call.1} parent=1 // pred_region
      %s11 = ssub.s32 128, 128
      %12 = vsyncadd [#allocation3], %s11
      %s14 = sshll.u32 [#allocation2], 4
      %s15 = int_to_ptr.vmem [resolvable:$true] %s14
      %17 = dma.hbm_to_vmem [thread:$0]  %s0, 128, %s15, [#allocation3]
    $region5: #{tpu_custom_call.1} parent=1 // pred_fallthru
      _
    // Predicated region
    $region6: #{tpu_custom_call.1} parent=1 // pred_check
      _
    $region7: #{tpu_custom_call.1} parent=1 // pred_check_branch
      %19 = sbr.rel (0) target = $region9
    $region8: #{tpu_custom_call.1} parent=1 // pred_region
      %20 = dma.done [#allocation3], 128
    $region9: #{tpu_custom_call.1} parent=1 // pred_fallthru
      _
    %v21 = vld [vmem:[#allocation2] sm:$0xff]
    %22 = vrot.lane.b32.xlu0 %v21, 1
    %v23 = vpop.permute.xlu0 %22
    %24 = vst [vmem:[#allocation5] sm:$0xff] %v23
    // Predicated region
    $region10: #{tpu_custom_call.1} parent=1 // pred_check
      _
    $region11: #{tpu_custom_call.1} parent=1 // pred_check_branch
      %26 = sbr.rel (0) target = $region13
    $region12: #{tpu_custom_call.1} parent=1 // pred_region
      %s28 = ssub.s32 128, 128
      %29 = vsyncadd [#allocation4], %s28
      %s31 = sshll.u32 [#allocation5], 4
      %s32 = int_to_ptr.vmem [resolvable:$true] %s31
      %34 = dma.vmem_to_hbm [thread:$0]  %s32, 128, %s1, [#allocation4]
    $region13: #{tpu_custom_call.1} parent=1 // pred_fallthru
      _
    // Predicated region
    $region14: #{tpu_custom_call.1} parent=1 // pred_check
      _
    $region15: #{tpu_custom_call.1} parent=1 // pred_check_branch
      %36 = sbr.rel (0) target = $region17
    $region16: #{tpu_custom_call.1} parent=1 // pred_region
      %37 = dma.done [#allocation4], 128
    $region17: #{tpu_custom_call.1} parent=1 // pred_fallthru
      _
    %38 = vsyncpa [#allocation3], 1
    %39 = vsyncpa [#allocation4], 1

</llo_original>
